<compile_context>
chip_gen: v6e
topology: v6e:2x2x1
jax: 0.10.0
libtpu: 0.0.40
codegen_flags: <defaults>
</compile_context>

<pallas_src>
import jax
import jax.numpy as jnp
from jax.experimental import pallas as pl
from jax.experimental.pallas import tpu as pltpu

EMBED = 64      # dense1_* output / attention embed_dim
HIDDEN = 32     # dense2 output
NUM_HEADS = 2   # irrelevant after the seq_len==1 simplification (softmax == 1 per head)
LN_EPS = 1e-5   # torch.nn.LayerNorm default

PARAM_ORDER = [
    "v_w", "v_b",      # dense1_v                                    (input_dim, 64) / (1, 64)
    "vo_w", "vo_b",    # folded attention: in_proj_v then out_proj   (64, 64)        / (1, 64)
    "ln_w", "ln_b",    # layer_norm                                  (1, 64)         / (1, 64)
    "d2_w", "d2_b",    # dense2                                      (64, 32)        / (1, 32)
    "fin_wt", "fin_b", # output, weight pre-transposed               (1, 32)         / (1, 1)
]
# dense1_q / dense1_k and the q/k slices of attention.in_proj exist in the torch module but
# only feed a softmax that is exactly 1.0 for seq_len == 1 -> numerically dead, not loaded.


def _layer_norm(x, w, b):
    mean = jnp.mean(x, axis=-1, keepdims=True)
    var = jnp.mean(jnp.square(x - mean), axis=-1, keepdims=True)
    return (x - mean) * jax.lax.rsqrt(var + LN_EPS) * w + b


def transformer_kernel(x_ref, v_w_ref, v_b_ref, vo_w_ref, vo_b_ref,
                       ln_w_ref, ln_b_ref, d2_w_ref, d2_b_ref,
                       fin_wt_ref, fin_b_ref, o_ref):
    f32 = jnp.float32

    def linear(h, w_ref, b_ref):
        w = w_ref[...]
        # bf16 x bf16 on the MXU, f32 accumulation, f32 bias add.
        return jnp.dot(h.astype(w.dtype), w, preferred_element_type=f32) + b_ref[...]

    x = x_ref[...]                                        # (tile, input_dim), bf16 stream

    # v = relu(dense1_v(x))   (q / k branches are numerically dead; see header comment)
    v = jnp.maximum(linear(x, v_w_ref, v_b_ref), 0.0)

    # seq_len==1 MultiheadAttention == out_proj(in_proj_v(v)); the two projections are
    # pre-folded on the host into a single (64, 64) matmul.
    a = linear(v, vo_w_ref, vo_b_ref)

    a = _layer_norm(a, ln_w_ref[...], ln_b_ref[...])
    h = jnp.maximum(linear(a, d2_w_ref, d2_b_ref), 0.0)   # dense2 + relu; Dropout = identity

    # Final layer computed transposed so the output block is a lane-dense (1, tile) row:
    #   y^T = fin_w^T @ h^T   via a trans_b dot_general (contract both last dims).
    fin_wt = fin_wt_ref[...]                               # (1, HIDDEN) bf16
    yt = jax.lax.dot_general(fin_wt, h.astype(fin_wt.dtype),
                             dimension_numbers=(((1,), (1,)), ((), ())),
                             preferred_element_type=f32)   # (1, tile)
    o_ref[...] = jax.nn.sigmoid(yt + fin_b_ref[...])


def _choose_row_tile(n_rows, input_dim, x_itemsize, max_rows_per_tile=None):
    """Pick (rows_per_tile, num_grid_steps) from a VMEM budget.

    The kernel is pure HBM streaming with trivial compute, so large tiles amortize the
    ~0.35 us per-grid-step overhead.  Budget ~24 MiB of estimated per-step VMEM use,
    leaving wide margin under the 48 MiB vmem_limit and v7x's 64 MiB physical VMEM per
    TensorCore (v5e/v6e have 128 MiB and could go larger still).  The MXU geometry is
    deliberately NOT part of this heuristic (mem-bound on every generation).
    """
    # Grid-invariant weights are still double-buffered by the pipeline; subtract them.
    weight_bytes = 2 * (input_dim * EMBED + 2 * EMBED * EMBED) * 2 + 64 * 1024
    budget = 24 * 1024 * 1024 - weight_bytes
    # Per row: double-buffered x block + f32 v/a/h (and centered/normalized copies), their
    # bf16 casts, lane-padded LayerNorm (row,1) temporaries, and the (1,tile) output block.
    bytes_per_row = 2 * input_dim * x_itemsize + 3072
    # NOTE: input_dim large enough to blow VMEM on its own would also need K-tiling (out of scope).
    max_tile = min(8192, max(512, budget // bytes_per_row // 512 * 512))
    if max_rows_per_tile is not None:
        max_tile = min(max_tile, max_rows_per_tile)
    if n_rows <= max_tile:
        # Single grid step: one tile rounded to 16 rows (bf16 sublane packing).
        return max(16, ((n_rows + 15) // 16) * 16), 1
    steps = pl.cdiv(n_rows, max_tile)
    if steps % 2:                     # even step count keeps both v7x TensorCores busy
        steps += 1
    tile = ((pl.cdiv(n_rows, steps) + 127) // 128) * 128   # 128-aligned for lane-dense output
    return tile, steps


def transformer_forward(x, params, *, max_rows_per_tile=None):
    """x: (n_rows, input_dim), ideally bfloat16 (f32 also accepted). Returns (n_rows, 1) f32."""
    n_rows, input_dim = x.shape
    tile, steps = _choose_row_tile(n_rows, input_dim, x.dtype.itemsize, max_rows_per_tile)
    padded = tile * steps
    if padded != n_rows:
        x = jnp.pad(x, ((0, padded - n_rows), (0, 0)))

    args = [params[k] for k in PARAM_ORDER]

    in_specs = [pl.BlockSpec((tile, input_dim), lambda i: (i, 0))]
    # Grid-invariant weight blocks (same block index every step) -> DMA'd once by the pipeline.
    in_specs += [pl.BlockSpec(a.shape, lambda i: (0, 0)) for a in args]

    out = pl.pallas_call(
        transformer_kernel,
        out_shape=jax.ShapeDtypeStruct((1, padded), jnp.float32),   # lane-dense output row
        grid=(steps,),
        in_specs=in_specs,
        out_specs=pl.BlockSpec((1, tile), lambda i: (0, i)),
        compiler_params=pltpu.CompilerParams(
            dimension_semantics=("parallel",),
            vmem_limit_bytes=48 * 1024 * 1024),
    )(x, *args)
    # Back to the (n_rows, 1) column the torch module returns.
    return out.reshape(padded, 1)[:n_rows]


def init_params(key, input_dim):
    """Deterministic synthetic f32 parameters (torch shapes, weights pre-transposed to
    (in_features, out_features))."""
    ks = jax.random.split(key, 10)

    def nrm(k, shape, scale=0.05):
        return scale * jax.random.normal(k, shape, dtype=jnp.float32)

    return {
        "v_w": nrm(ks[0], (input_dim, EMBED)),
        "v_b": nrm(ks[1], (1, EMBED), 0.01),
        "in_v_w": nrm(ks[2], (EMBED, EMBED)),   # attention.in_proj_weight rows 2E:3E, transposed
        "in_v_b": nrm(ks[3], (1, EMBED), 0.01),
        "out_w": nrm(ks[4], (EMBED, EMBED)),    # attention.out_proj, transposed
        "out_b": nrm(ks[5], (1, EMBED), 0.01),
        "ln_w": jnp.ones((1, EMBED), jnp.float32),   # torch LayerNorm default init
        "ln_b": jnp.zeros((1, EMBED), jnp.float32),
        "d2_w": nrm(ks[6], (EMBED, HIDDEN)),
        "d2_b": nrm(ks[7], (1, HIDDEN), 0.01),
        "fin_w": nrm(ks[8], (HIDDEN, 1)),
        "fin_b": nrm(ks[9], (1, 1), 0.01),
    }


def fold_params(raw, weight_dtype=jnp.bfloat16):
    """Exact host-side f32 algebra (fold in_proj_v into out_proj), then cast matmul weights
    to bf16 for the MXU.  Biases / LayerNorm params stay f32."""
    wd = weight_dtype
    vo_w = raw["in_v_w"] @ raw["out_w"]                      # no nonlinearity in between
    vo_b = raw["in_v_b"] @ raw["out_w"] + raw["out_b"]
    return {
        "v_w": raw["v_w"].astype(wd), "v_b": raw["v_b"],
        "vo_w": vo_w.astype(wd), "vo_b": vo_b,
        "ln_w": raw["ln_w"], "ln_b": raw["ln_b"],
        "d2_w": raw["d2_w"].astype(wd), "d2_b": raw["d2_b"],
        "fin_wt": raw["fin_w"].T.astype(wd),                 # (1, HIDDEN) for transposed matmul
        "fin_b": raw["fin_b"],
    }


def reference_forward(x, raw):
    """Pure-JAX f32 reference for the torch forward (seq_len==1 attention handled exactly:
    softmax over one key is 1.0, so attention == out_proj(in_proj_v(v)))."""
    v = jnp.maximum(x @ raw["v_w"] + raw["v_b"], 0.0)
    a = (v @ raw["in_v_w"] + raw["in_v_b"]) @ raw["out_w"] + raw["out_b"]
    mean = a.mean(-1, keepdims=True)
    var = jnp.square(a - mean).mean(-1, keepdims=True)
    a = (a - mean) / jnp.sqrt(var + LN_EPS) * raw["ln_w"] + raw["ln_b"]
    h = jnp.maximum(a @ raw["d2_w"] + raw["d2_b"], 0.0)
    return jax.nn.sigmoid(h @ raw["fin_w"] + raw["fin_b"])


if __name__ == "__main__":
    key = jax.random.PRNGKey(0)
    kx, kx2, kp = jax.random.split(key, 3)

    input_dim, n_rows = 32, 16
    raw = init_params(kp, input_dim)
    kparams = fold_params(raw)

    x = jax.random.normal(kx, (n_rows, input_dim), dtype=jnp.float32)
    # Stream x in bf16, produced once upstream of the wrapper (the kernel truncates to bf16
    # before the first matmul anyway, so this is bit-identical and halves HBM reads).
    x_bf16 = x.astype(jnp.bfloat16)

    out = jax.block_until_ready(transformer_forward(x_bf16, kparams))
    assert out.shape == (n_rows, 1), out.shape
    assert bool(jnp.all(jnp.isfinite(out)))
    assert bool(jnp.all((out > 0.0) & (out < 1.0)))        # sigmoid output range

    ref = reference_forward(x_bf16.astype(jnp.float32), raw)
    max_err = float(jnp.max(jnp.abs(out - ref)))
    assert max_err < 3e-2, max_err                          # bf16 weights/activations vs f32 ref

    # Second (still small) check: force a 128-row tile so the multi-step grid, row padding
    # and the multi-block lane-dense output path are all exercised.
    n2 = 500
    x2 = jax.random.normal(kx2, (n2, input_dim), dtype=jnp.float32).astype(jnp.bfloat16)
    out2 = jax.block_until_ready(transformer_forward(x2, kparams, max_rows_per_tile=128))
    assert out2.shape == (n2, 1), out2.shape
    ref2 = reference_forward(x2.astype(jnp.float32), raw)
    max_err2 = float(jnp.max(jnp.abs(out2 - ref2)))
    assert max_err2 < 3e-2, max_err2

    print("KERNEL_OK")
</pallas_src>

<mosaic_0001>
module attributes {stable_mosaic.version = 11 : i64} {
  func.func @transformer_kernel(%arg0: i32, %arg1: memref<16x32xbf16, #tpu.memory_space<vmem>>, %arg2: memref<32x64xbf16, #tpu.memory_space<vmem>>, %arg3: memref<1x64xf32, #tpu.memory_space<vmem>>, %arg4: memref<64x64xbf16, #tpu.memory_space<vmem>>, %arg5: memref<1x64xf32, #tpu.memory_space<vmem>>, %arg6: memref<1x64xf32, #tpu.memory_space<vmem>>, %arg7: memref<1x64xf32, #tpu.memory_space<vmem>>, %arg8: memref<64x32xbf16, #tpu.memory_space<vmem>>, %arg9: memref<1x32xf32, #tpu.memory_space<vmem>>, %arg10: memref<1x32xbf16, #tpu.memory_space<vmem>>, %arg11: memref<1x1xf32, #tpu.memory_space<vmem>>, %arg12: memref<1x16xf32, #tpu.memory_space<vmem>>) attributes {dimension_semantics = [#tpu.dimension_semantics<parallel>], iteration_bounds = array<i64: 1>, scalar_prefetch = 0 : i64, scratch_operands = 0 : i64, tpu.core_type = #tpu.core_type<tc>, window_params = [{transform_indices = @transform_0, window_bounds = array<i64: 16, 32>}, {pipeline_mode = #tpu.pipeline_mode<synchronous>, transform_indices = @transform_1, window_bounds = array<i64: 32, 64>}, {pipeline_mode = #tpu.pipeline_mode<synchronous>, transform_indices = @transform_2, window_bounds = array<i64: 1, 64>}, {pipeline_mode = #tpu.pipeline_mode<synchronous>, transform_indices = @transform_3, window_bounds = array<i64: 64, 64>}, {pipeline_mode = #tpu.pipeline_mode<synchronous>, transform_indices = @transform_4, window_bounds = array<i64: 1, 64>}, {pipeline_mode = #tpu.pipeline_mode<synchronous>, transform_indices = @transform_5, window_bounds = array<i64: 1, 64>}, {pipeline_mode = #tpu.pipeline_mode<synchronous>, transform_indices = @transform_6, window_bounds = array<i64: 1, 64>}, {pipeline_mode = #tpu.pipeline_mode<synchronous>, transform_indices = @transform_7, window_bounds = array<i64: 64, 32>}, {pipeline_mode = #tpu.pipeline_mode<synchronous>, transform_indices = @transform_8, window_bounds = array<i64: 1, 32>}, {pipeline_mode = #tpu.pipeline_mode<synchronous>, transform_indices = @transform_9, window_bounds = array<i64: 1, 32>}, {pipeline_mode = #tpu.pipeline_mode<synchronous>, transform_indices = @transform_10, window_bounds = array<i64: 1, 1>}, {transform_indices = @transform_11, window_bounds = array<i64: 1, 16>}]} {
    %c0 = arith.constant 0 : index
    %c0_0 = arith.constant 0 : index
    %0 = vector.load %arg1[%c0, %c0_0] : memref<16x32xbf16, #tpu.memory_space<vmem>>, vector<16x32xbf16>
    %c0_1 = arith.constant 0 : index
    %c0_2 = arith.constant 0 : index
    %1 = vector.load %arg2[%c0_1, %c0_2] : memref<32x64xbf16, #tpu.memory_space<vmem>>, vector<32x64xbf16>
    %cst = arith.constant dense<0.000000e+00> : vector<16x64xf32>
    %2 = tpu.matmul %0, %1, %cst {dimension_numbers = #tpu.dot_dimension_numbers<[1], [0], [0], [1], [0, 0, 1, 1], [], []>} : vector<16x32xbf16>, vector<32x64xbf16>, vector<16x64xf32> -> vector<16x64xf32>
    %c0_3 = arith.constant 0 : index
    %c0_4 = arith.constant 0 : index
    %3 = vector.load %arg3[%c0_3, %c0_4] : memref<1x64xf32, #tpu.memory_space<vmem>>, vector<1x64xf32>
    %4 = vector.broadcast %3 : vector<1x64xf32> to vector<16x64xf32>
    %5 = arith.addf %2, %4 : vector<16x64xf32>
    %cst_5 = arith.constant 0.000000e+00 : f32
    %6 = vector.broadcast %cst_5 : f32 to vector<16x64xf32>
    %7 = arith.maximumf %5, %6 : vector<16x64xf32>
    %c0_6 = arith.constant 0 : index
    %c0_7 = arith.constant 0 : index
    %8 = vector.load %arg4[%c0_6, %c0_7] : memref<64x64xbf16, #tpu.memory_space<vmem>>, vector<64x64xbf16>
    %9 = arith.truncf %7 : vector<16x64xf32> to vector<16x64xbf16>
    %cst_8 = arith.constant dense<0.000000e+00> : vector<16x64xf32>
    %10 = tpu.matmul %9, %8, %cst_8 {dimension_numbers = #tpu.dot_dimension_numbers<[1], [0], [0], [1], [0, 0, 1, 1], [], []>} : vector<16x64xbf16>, vector<64x64xbf16>, vector<16x64xf32> -> vector<16x64xf32>
    %c0_9 = arith.constant 0 : index
    %c0_10 = arith.constant 0 : index
    %11 = vector.load %arg5[%c0_9, %c0_10] : memref<1x64xf32, #tpu.memory_space<vmem>>, vector<1x64xf32>
    %12 = vector.broadcast %11 : vector<1x64xf32> to vector<16x64xf32>
    %13 = arith.addf %10, %12 : vector<16x64xf32>
    %c0_11 = arith.constant 0 : index
    %c0_12 = arith.constant 0 : index
    %14 = vector.load %arg6[%c0_11, %c0_12] : memref<1x64xf32, #tpu.memory_space<vmem>>, vector<1x64xf32>
    %c0_13 = arith.constant 0 : index
    %c0_14 = arith.constant 0 : index
    %15 = vector.load %arg7[%c0_13, %c0_14] : memref<1x64xf32, #tpu.memory_space<vmem>>, vector<1x64xf32>
    %cst_15 = arith.constant dense<0.000000e+00> : vector<16xf32>
    %16 = vector.multi_reduction <add>, %13, %cst_15 [1] : vector<16x64xf32> to vector<16xf32>
    %17 = vector.shape_cast %16 : vector<16xf32> to vector<16x1xf32>
    %cst_16 = arith.constant 6.400000e+01 : f32
    %18 = vector.broadcast %cst_16 : f32 to vector<16x1xf32>
    %19 = arith.divf %17, %18 : vector<16x1xf32>
    %20 = vector.broadcast %19 : vector<16x1xf32> to vector<16x64xf32>
    %21 = arith.subf %13, %20 : vector<16x64xf32>
    %22 = arith.mulf %21, %21 : vector<16x64xf32>
    %cst_17 = arith.constant dense<0.000000e+00> : vector<16xf32>
    %23 = vector.multi_reduction <add>, %22, %cst_17 [1] : vector<16x64xf32> to vector<16xf32>
    %24 = vector.shape_cast %23 : vector<16xf32> to vector<16x1xf32>
    %cst_18 = arith.constant 6.400000e+01 : f32
    %25 = vector.broadcast %cst_18 : f32 to vector<16x1xf32>
    %26 = arith.divf %24, %25 : vector<16x1xf32>
    %27 = vector.broadcast %19 : vector<16x1xf32> to vector<16x64xf32>
    %28 = arith.subf %13, %27 : vector<16x64xf32>
    %cst_19 = arith.constant 9.99999974E-6 : f32
    %29 = vector.broadcast %cst_19 : f32 to vector<16x1xf32>
    %30 = arith.addf %26, %29 : vector<16x1xf32>
    %31 = math.rsqrt %30 : vector<16x1xf32>
    %32 = vector.broadcast %31 : vector<16x1xf32> to vector<16x64xf32>
    %33 = arith.mulf %28, %32 : vector<16x64xf32>
    %34 = vector.broadcast %14 : vector<1x64xf32> to vector<16x64xf32>
    %35 = arith.mulf %33, %34 : vector<16x64xf32>
    %36 = vector.broadcast %15 : vector<1x64xf32> to vector<16x64xf32>
    %37 = arith.addf %35, %36 : vector<16x64xf32>
    %c0_20 = arith.constant 0 : index
    %c0_21 = arith.constant 0 : index
    %38 = vector.load %arg8[%c0_20, %c0_21] : memref<64x32xbf16, #tpu.memory_space<vmem>>, vector<64x32xbf16>
    %39 = arith.truncf %37 : vector<16x64xf32> to vector<16x64xbf16>
    %cst_22 = arith.constant dense<0.000000e+00> : vector<16x32xf32>
    %40 = tpu.matmul %39, %38, %cst_22 {dimension_numbers = #tpu.dot_dimension_numbers<[1], [0], [0], [1], [0, 0, 1, 1], [], []>} : vector<16x64xbf16>, vector<64x32xbf16>, vector<16x32xf32> -> vector<16x32xf32>
    %c0_23 = arith.constant 0 : index
    %c0_24 = arith.constant 0 : index
    %41 = vector.load %arg9[%c0_23, %c0_24] : memref<1x32xf32, #tpu.memory_space<vmem>>, vector<1x32xf32>
    %42 = vector.broadcast %41 : vector<1x32xf32> to vector<16x32xf32>
    %43 = arith.addf %40, %42 : vector<16x32xf32>
    %cst_25 = arith.constant 0.000000e+00 : f32
    %44 = vector.broadcast %cst_25 : f32 to vector<16x32xf32>
    %45 = arith.maximumf %43, %44 : vector<16x32xf32>
    %c0_26 = arith.constant 0 : index
    %c0_27 = arith.constant 0 : index
    %46 = vector.load %arg10[%c0_26, %c0_27] : memref<1x32xbf16, #tpu.memory_space<vmem>>, vector<1x32xbf16>
    %47 = arith.truncf %45 : vector<16x32xf32> to vector<16x32xbf16>
    %cst_28 = arith.constant dense<0.000000e+00> : vector<1x16xf32>
    %48 = tpu.matmul %46, %47, %cst_28 {dimension_numbers = #tpu.dot_dimension_numbers<[1], [1], [0], [0], [0, 0, 1, 0], [], []>} : vector<1x32xbf16>, vector<16x32xbf16>, vector<1x16xf32> -> vector<1x16xf32>
    %c0_29 = arith.constant 0 : index
    %c0_30 = arith.constant 0 : index
    %49 = vector.load %arg11[%c0_29, %c0_30] : memref<1x1xf32, #tpu.memory_space<vmem>>, vector<1x1xf32>
    %50 = vector.broadcast %49 : vector<1x1xf32> to vector<1x16xf32>
    %51 = arith.addf %48, %50 : vector<1x16xf32>
    %52 = arith.negf %51 : vector<1x16xf32>
    %53 = math.exp %52 : vector<1x16xf32>
    %cst_31 = arith.constant 1.000000e+00 : f32
    %54 = vector.broadcast %cst_31 : f32 to vector<1x16xf32>
    %55 = arith.addf %54, %53 : vector<1x16xf32>
    %56 = arith.divf %54, %55 : vector<1x16xf32>
    %c0_32 = arith.constant 0 : index
    %c0_33 = arith.constant 0 : index
    %57 = vector.load %arg12[%c0_32, %c0_33] : memref<1x16xf32, #tpu.memory_space<vmem>>, vector<1x16xf32>
    tpu.vector_store %arg12[%c0_32, %c0_33], %56 {strides = array<i32>} : memref<1x16xf32, #tpu.memory_space<vmem>>, vector<1x16xf32>,
    return
  }
  func.func @transform_0(%arg0: i32) -> (i32, i32) {
    %c0_i32 = arith.constant 0 : i32
    %c0_i32_0 = arith.constant 0 : i32
    return %arg0, %c0_i32 : i32, i32
  }
  func.func @transform_1(%arg0: i32) -> (i32, i32) {
    %c0_i32 = arith.constant 0 : i32
    %c0_i32_0 = arith.constant 0 : i32
    %c0_i32_1 = arith.constant 0 : i32
    return %c0_i32, %c0_i32_0 : i32, i32
  }
  func.func @transform_2(%arg0: i32) -> (i32, i32) {
    %c0_i32 = arith.constant 0 : i32
    %c0_i32_0 = arith.constant 0 : i32
    %c0_i32_1 = arith.constant 0 : i32
    return %c0_i32, %c0_i32_0 : i32, i32
  }
  func.func @transform_3(%arg0: i32) -> (i32, i32) {
    %c0_i32 = arith.constant 0 : i32
    %c0_i32_0 = arith.constant 0 : i32
    %c0_i32_1 = arith.constant 0 : i32
    return %c0_i32, %c0_i32_0 : i32, i32
  }
  func.func @transform_4(%arg0: i32) -> (i32, i32) {
    %c0_i32 = arith.constant 0 : i32
    %c0_i32_0 = arith.constant 0 : i32
    %c0_i32_1 = arith.constant 0 : i32
    return %c0_i32, %c0_i32_0 : i32, i32
  }
  func.func @transform_5(%arg0: i32) -> (i32, i32) {
    %c0_i32 = arith.constant 0 : i32
    %c0_i32_0 = arith.constant 0 : i32
    %c0_i32_1 = arith.constant 0 : i32
    return %c0_i32, %c0_i32_0 : i32, i32
  }
  func.func @transform_6(%arg0: i32) -> (i32, i32) {
    %c0_i32 = arith.constant 0 : i32
    %c0_i32_0 = arith.constant 0 : i32
    %c0_i32_1 = arith.constant 0 : i32
    return %c0_i32, %c0_i32_0 : i32, i32
  }
  func.func @transform_7(%arg0: i32) -> (i32, i32) {
    %c0_i32 = arith.constant 0 : i32
    %c0_i32_0 = arith.constant 0 : i32
    %c0_i32_1 = arith.constant 0 : i32
    return %c0_i32, %c0_i32_0 : i32, i32
  }
  func.func @transform_8(%arg0: i32) -> (i32, i32) {
    %c0_i32 = arith.constant 0 : i32
    %c0_i32_0 = arith.constant 0 : i32
    %c0_i32_1 = arith.constant 0 : i32
    return %c0_i32, %c0_i32_0 : i32, i32
  }
  func.func @transform_9(%arg0: i32) -> (i32, i32) {
    %c0_i32 = arith.constant 0 : i32
    %c0_i32_0 = arith.constant 0 : i32
    %c0_i32_1 = arith.constant 0 : i32
    return %c0_i32, %c0_i32_0 : i32, i32
  }
  func.func @transform_10(%arg0: i32) -> (i32, i32) {
    %c0_i32 = arith.constant 0 : i32
    %c0_i32_0 = arith.constant 0 : i32
    %c0_i32_1 = arith.constant 0 : i32
    return %c0_i32, %c0_i32_0 : i32, i32
  }
  func.func @transform_11(%arg0: i32) -> (i32, i32) {
    %c0_i32 = arith.constant 0 : i32
    %c0_i32_0 = arith.constant 0 : i32
    return %c0_i32, %arg0 : i32, i32
  }
}

</mosaic_0001>

<llo_original>
// kernel: tpu_custom_call.1
$region0: #{tpu_custom_call.1}
  #allocation0 [shape = 'u32[]', space=smem, size = 0x4, offset = 0x4, fixed_abs, tag = 'smem constant byte address 0x4 - core index']
  #allocation1 [shape = 'u32[144,128]{1,0:T(1,128)}', space=vmem, size = 0x12000, scoped, tag = 'internal scratch']
  #allocation2 [shape = 'f32[1,1]{1,0:T(1,128)S(1)}', space=vmem, size = 0x200, scoped, tag = 'scoped memory for tpu_custom_call.1']
  %s0 = inlined_call_operand.hbm [shape: bf16[16,32], index: 0, kind: input, shape index: {}]
  %s1 = inlined_call_operand.vmem [shape: bf16[32,64], index: 1, kind: input, shape index: {}]
  %s2 = inlined_call_operand.vmem [shape: f32[1,64], index: 2, kind: input, shape index: {}]
  %s3 = inlined_call_operand.vmem [shape: bf16[64,64], index: 3, kind: input, shape index: {}]
  %s4 = inlined_call_operand.vmem [shape: f32[1,64], index: 4, kind: input, shape index: {}]
  %s5 = inlined_call_operand.vmem [shape: f32[1,64], index: 5, kind: input, shape index: {}]
  %s6 = inlined_call_operand.vmem [shape: f32[1,64], index: 6, kind: input, shape index: {}]
  %s7 = inlined_call_operand.vmem [shape: bf16[64,32], index: 7, kind: input, shape index: {}]
  %s8 = inlined_call_operand.vmem [shape: f32[1,32], index: 8, kind: input, shape index: {}]
  %s9 = inlined_call_operand.vmem [shape: bf16[1,32], index: 9, kind: input, shape index: {}]
  %s10 = inlined_call_operand.<no memory space> [shape: f32[1,1], index: 10, kind: input, shape index: {}]
  %s11 = inlined_call_operand.hbm [shape: f32[1,16], index: 11, kind: output, shape index: {}]
  %s12 = sld [smem:[#allocation0]]
  $region58: #{tpu_custom_call.1} parent=0
    _
  %s14 = ssub.s32 1, %s12
  %s15 = scalar_select 0, %s14, %s12
  %v16 = vstv %s10
  %17 = vst [vmem:[#allocation2] sm:$0x1] %v16
  $region1: #{tpu_custom_call.1} parent=0
    #allocation3 [shape = 'u8[4096]{0}', space=vmem, size = 0x1000, scoped, tag = 'input window, operand 0, single buffered']
    #allocation4 [shape = 's32[1]{0}', space=sflag, size = 0x4, scoped, tag = 'scoped memory for tpu_custom_call.1']
    #allocation5 [shape = 's32[1]{0}', space=sflag, size = 0x4, scoped, tag = 'scoped memory for tpu_custom_call.1']
    #allocation6 [shape = 'u8[512]{0}', space=vmem, size = 0x400, scoped, tag = 'output window, operand 0, single buffered']
    %18 = vsyncpa [#allocation4], 0
    %19 = vsyncpa [#allocation5], 0
    // Predicated region
    $region2: #{tpu_custom_call.1} parent=1 // pred_check
      _
    $region3: #{tpu_custom_call.1} parent=1 // pred_check_branch
      %21 = sbr.rel (0) target = $region5
    $region4: #{tpu_custom_call.1} parent=1 // pred_region
      %s23 = ssub.s32 128, 128
      %24 = vsyncadd [#allocation4], %s23
      %s25 = sshll.u32 [#allocation3], 4
      %s26 = int_to_ptr.vmem [resolvable:$true] %s25
      %31 = dma.hbm_to_vmem [thread:$0]  %s0, 128, %s26, [#allocation4], 64, 64, 4
    $region5: #{tpu_custom_call.1} parent=1 // pred_fallthru
      _
    // Predicated region
    $region6: #{tpu_custom_call.1} parent=1 // pred_check
      _
    $region7: #{tpu_custom_call.1} parent=1 // pred_check_branch
      %33 = sbr.rel (0) target = $region9
    $region8: #{tpu_custom_call.1} parent=1 // pred_region
      _
    $region9: #{tpu_custom_call.1} parent=1 // pred_fallthru
      _
    // Predicated region
    $region10: #{tpu_custom_call.1} parent=1 // pred_check
      _
    $region11: #{tpu_custom_call.1} parent=1 // pred_check_branch
      %35 = sbr.rel (0) target = $region13
    $region12: #{tpu_custom_call.1} parent=1 // pred_region
      _
    $region13: #{tpu_custom_call.1} parent=1 // pred_fallthru
      _
    // Predicated region
    $region14: #{tpu_custom_call.1} parent=1 // pred_check
      _
    $region15: #{tpu_custom_call.1} parent=1 // pred_check_branch
      %37 = sbr.rel (0) target = $region17
    $region16: #{tpu_custom_call.1} parent=1 // pred_region
      _
    $region17: #{tpu_custom_call.1} parent=1 // pred_fallthru
      _
    // Predicated region
    $region18: #{tpu_custom_call.1} parent=1 // pred_check
      _
    $region19: #{tpu_custom_call.1} parent=1 // pred_check_branch
      %39 = sbr.rel (0) target = $region21
    $region20: #{tpu_custom_call.1} parent=1 // pred_region
      _
    $region21: #{tpu_custom_call.1} parent=1 // pred_fallthru
      _
    // Predicated region
    $region22: #{tpu_custom_call.1} parent=1 // pred_check
      _
    $region23: #{tpu_custom_call.1} parent=1 // pred_check_branch
      %41 = sbr.rel (0) target = $region25
    $region24: #{tpu_custom_call.1} parent=1 // pred_region
      _
    $region25: #{tpu_custom_call.1} parent=1 // pred_fallthru
      _
    // Predicated region
    $region26: #{tpu_custom_call.1} parent=1 // pred_check
      _
    $region27: #{tpu_custom_call.1} parent=1 // pred_check_branch
      %43 = sbr.rel (0) target = $region29
    $region28: #{tpu_custom_call.1} parent=1 // pred_region
      _
    $region29: #{tpu_custom_call.1} parent=1 // pred_fallthru
      _
    // Predicated region
    $region30: #{tpu_custom_call.1} parent=1 // pred_check
      _
    $region31: #{tpu_custom_call.1} parent=1 // pred_check_branch
      %45 = sbr.rel (0) target = $region33
    $region32: #{tpu_custom_call.1} parent=1 // pred_region
      _
    $region33: #{tpu_custom_call.1} parent=1 // pred_fallthru
      _
    // Predicated region
    $region34: #{tpu_custom_call.1} parent=1 // pred_check
      _
    $region35: #{tpu_custom_call.1} parent=1 // pred_check_branch
      %47 = sbr.rel (0) target = $region37
    $region36: #{tpu_custom_call.1} parent=1 // pred_region
      _
    $region37: #{tpu_custom_call.1} parent=1 // pred_fallthru
      _
    // Predicated region
    $region38: #{tpu_custom_call.1} parent=1 // pred_check
      _
    $region39: #{tpu_custom_call.1} parent=1 // pred_check_branch
      %49 = sbr.rel (0) target = $region41
    $region40: #{tpu_custom_call.1} parent=1 // pred_region
      _
    $region41: #{tpu_custom_call.1} parent=1 // pred_fallthru
      _
    // Predicated region
    $region42: #{tpu_custom_call.1} parent=1 // pred_check
      _
    $region43: #{tpu_custom_call.1} parent=1 // pred_check_branch
      %51 = sbr.rel (0) target = $region45
    $region44: #{tpu_custom_call.1} parent=1 // pred_region
      _
    $region45: #{tpu_custom_call.1} parent=1 // pred_fallthru
      _
    // Predicated region
    $region46: #{tpu_custom_call.1} parent=1 // pred_check
      _
    $region47: #{tpu_custom_call.1} parent=1 // pred_check_branch
      %53 = sbr.rel (0) target = $region49
    $region48: #{tpu_custom_call.1} parent=1 // pred_region
      %54 = dma.done [#allocation4], 128
    $region49: #{tpu_custom_call.1} parent=1 // pred_fallthru
      _
    %v56 = vld [vmem:[#allocation3] sm:$0xf]
    %v57 = vld [vmem:[#allocation3 + $0x4] sm:$0xf]
    %v58 = vld [vmem:[%s1] sm:$0xf]
    %v59 = vld [vmem:[%s1 + $0x4] sm:$0xf]
    %v60 = vld [vmem:[%s1 + $0x8] sm:$0xf]
    %v61 = vld [vmem:[%s1 + $0xc] sm:$0xf]
    %v62 = vld [vmem:[%s2] sm:$0x1]
    %v64 = vlaneseq
    %v65 = vshrl.u32 %v64, 7
    %v66 = vsub.s32 0, %v65
    %v67 = vrot.slane %v62, %v66
    %v71 = vunpack.c.l.b16 %v56
    %v72 = vunpack.c.l.b16 %v57
    %v73 = vpack.c.b16 %v72, %v71
    %v78 = vunpack.c.l.b16 %v58
    %v79 = vunpack.c.l.b16 %v59
    %v80 = vunpack.c.l.b16 %v60
    %v81 = vunpack.c.l.b16 %v61
    %v82 = vpack.c.b16 %v79, %v78
    %v83 = vpack.c.b16 %v81, %v80
    %vm86 = vcmask 261120
    %v88 = vsel %vm86, %v73, 0
    %90 = vmatprep.subr.bf16.mxu0 0
    %91 = vmatpush1.bf16.msra.mxu0 0
    %92 = vmatprep.subr.bf16.mxu0 0
    %93 = vmatpush1.bf16.msra.mxu0 0
    %94 = vmatprep.subr.bf16.mxu0 0
    %95 = vmatpush1.bf16.msra.mxu0 0
    %96 = vmatprep.subr.bf16.mxu0 0
    %97 = vmatpush1.bf16.msra.mxu0 0
    %98 = vmatprep.subr.bf16.mxu0 0
    %99 = vmatpush1.bf16.msra.mxu0 0
    %100 = vmatprep.subr.bf16.mxu0 0
    %101 = vmatpush1.bf16.msra.mxu0 0
    %102 = vmatprep.subr.bf16.mxu0 0
    %103 = vmatpush1.bf16.msra.mxu0 %v83
    %104 = vmatprep.subr.bf16.mxu0 0
    %105 = vmatpush1.bf16.msra.mxu0 %v82
    %106 = vmatprep.subr.bf16.mxu0 0
    %107 = vmatpush2.bf16.msra.mxu0 0
    %108 = vmatprep.subr.bf16.mxu0 0
    %109 = vmatpush2.bf16.msra.mxu0 0
    %110 = vmatprep.subr.bf16.mxu0 0
    %111 = vmatpush2.bf16.msra.mxu0 0
    %112 = vmatprep.subr.bf16.mxu0 0
    %113 = vmatpush2.bf16.msra.mxu0 0
    %114 = vmatprep.subr.bf16.mxu0 0
    %115 = vmatpush2.bf16.msra.mxu0 0
    %116 = vmatprep.subr.bf16.mxu0 0
    %117 = vmatpush2.bf16.msra.mxu0 0
    %118 = vmatprep.subr.bf16.mxu0 0
    %119 = vmatpush2.bf16.msra.mxu0 0
    %120 = vmatprep.subr.bf16.mxu0 0
    %121 = vmatpush2.bf16.msra.mxu0 0
    %122 = vmatprep.mubr.bf16.mxu0 0
    %123 = vmatmul.mubr.bf16.gmra.mxu0 %v88
    %v124 = vpop.f32.mrf.mxu0
    %v125 = vadd.f32 %v67, %v124
    %v126 = vpop.f32.mrf.mxu0
    %v127 = vpop.f32.mrf.mxu0
    %v128 = vadd.f32 %v67, %v127
    %v129 = vpop.f32.mrf.mxu0
    %130 = vdwg.mxu0
    %v131 = vmax.f32 %v125, 0.0
    %v132 = vmax.f32 %v128, 0.0
    %v133 = vld [vmem:[%s3] sm:$0xf]
    %v134 = vld [vmem:[%s3 + $0x4] sm:$0xf]
    %v135 = vld [vmem:[%s3 + $0x8] sm:$0xf]
    %v136 = vld [vmem:[%s3 + $0xc] sm:$0xf]
    %v137 = vld [vmem:[%s3 + $0x10] sm:$0xf]
    %v138 = vld [vmem:[%s3 + $0x14] sm:$0xf]
    %v139 = vld [vmem:[%s3 + $0x18] sm:$0xf]
    %v140 = vld [vmem:[%s3 + $0x1c] sm:$0xf]
    %v141 = vpack.c.bf16 %v132, %v131
    %v142 = vld [vmem:[%s4] sm:$0x1]
    %v144 = vlaneseq
    %v145 = vshrl.u32 %v144, 7
    %v146 = vsub.s32 0, %v145
    %v147 = vrot.slane %v142, %v146
    %v157 = vunpack.c.l.b16 %v133
    %v158 = vunpack.c.l.b16 %v134
    %v159 = vunpack.c.l.b16 %v135
    %v160 = vunpack.c.l.b16 %v136
    %v161 = vunpack.c.l.b16 %v137
    %v162 = vunpack.c.l.b16 %v138
    %v163 = vunpack.c.l.b16 %v139
    %v164 = vunpack.c.l.b16 %v140
    %v165 = vpack.c.b16 %v158, %v157
    %v166 = vpack.c.b16 %v160, %v159
    %v167 = vpack.c.b16 %v162, %v161
    %v168 = vpack.c.b16 %v164, %v163
    %vm173 = vcmask 523264
    %v175 = vsel %vm173, %v141, 0
    %177 = vmatprep.subr.bf16.mxu0 0
    %178 = vmatpush1.bf16.msra.mxu0 0
    %179 = vmatprep.subr.bf16.mxu0 0
    %180 = vmatpush1.bf16.msra.mxu0 0
    %181 = vmatprep.subr.bf16.mxu0 0
    %182 = vmatpush1.bf16.msra.mxu0 0
    %183 = vmatprep.subr.bf16.mxu0 0
    %184 = vmatpush1.bf16.msra.mxu0 0
    %185 = vmatprep.subr.bf16.mxu0 0
    %186 = vmatpush1.bf16.msra.mxu0 %v168
    %187 = vmatprep.subr.bf16.mxu0 0
    %188 = vmatpush1.bf16.msra.mxu0 %v167
    %189 = vmatprep.subr.bf16.mxu0 0
    %190 = vmatpush1.bf16.msra.mxu0 %v166
    %191 = vmatprep.subr.bf16.mxu0 0
    %192 = vmatpush1.bf16.msra.mxu0 %v165
    %193 = vmatprep.subr.bf16.mxu0 0
    %194 = vmatpush2.bf16.msra.mxu0 0
    %195 = vmatprep.subr.bf16.mxu0 0
    %196 = vmatpush2.bf16.msra.mxu0 0
    %197 = vmatprep.subr.bf16.mxu0 0
    %198 = vmatpush2.bf16.msra.mxu0 0
    %199 = vmatprep.subr.bf16.mxu0 0
    %200 = vmatpush2.bf16.msra.mxu0 0
    %201 = vmatprep.subr.bf16.mxu0 0
    %202 = vmatpush2.bf16.msra.mxu0 0
    %203 = vmatprep.subr.bf16.mxu0 0
    %204 = vmatpush2.bf16.msra.mxu0 0
    %205 = vmatprep.subr.bf16.mxu0 0
    %206 = vmatpush2.bf16.msra.mxu0 0
    %207 = vmatprep.subr.bf16.mxu0 0
    %208 = vmatpush2.bf16.msra.mxu0 0
    %209 = vmatprep.mubr.bf16.mxu0 0
    %210 = vmatmul.mubr.bf16.gmra.mxu0 %v175
    %v211 = vpop.f32.mrf.mxu0
    %v212 = vadd.f32 %v147, %v211
    %v213 = vpop.f32.mrf.mxu0
    %v214 = vpop.f32.mrf.mxu0
    %v215 = vadd.f32 %v147, %v214
    %v216 = vpop.f32.mrf.mxu0
    %217 = vdwg.mxu0
    %v218 = vld [vmem:[%s5] sm:$0x1]
    %v219 = vld [vmem:[%s6] sm:$0x1]
    %v220 = vsel %vm173, %v212, 0.0
    %221 = vadd.xlane.f32.xlu0 %v220
    %v222 = vpop.xlane.xlu0 %221
    %v223 = vsel %vm173, %v215, 0.0
    %224 = vadd.xlane.f32.xlu0 %v223
    %v225 = vpop.xlane.xlu0 %224
    %v226 = vrcp.pop 64.0
    %v227 = vmul.f32 %v222, %v226
    %v228 = vmul.f32 %v225, %v226
    %v229 = vsub.f32 %v212, %v227
    %v230 = vsub.f32 %v215, %v228
    %v231 = vmul.f32 %v229, %v229
    %v232 = vmul.f32 %v230, %v230
    %v233 = vsel %vm173, %v231, 0.0
    %234 = vadd.xlane.f32.xlu0 %v233
    %v235 = vpop.xlane.xlu0 %234
    %v236 = vsel %vm173, %v232, 0.0
    %237 = vadd.xlane.f32.xlu0 %v236
    %v238 = vpop.xlane.xlu0 %237
    %v239 = vmul.f32 %v235, %v226
    %v240 = vmul.f32 %v238, %v226
    %v241 = vadd.f32 %v239, 1e-05
    %v242 = vadd.f32 %v240, 1e-05
    %v243 = vrsqrt.pop %v241
    %v244 = vrsqrt.pop %v242
    %v245 = vmul.f32 %v229, %v243
    %v246 = vmul.f32 %v230, %v244
    %v248 = vlaneseq
    %v249 = vshrl.u32 %v248, 7
    %v250 = vsub.s32 0, %v249
    %v251 = vrot.slane %v218, %v250
    %v253 = vmul.f32 %v245, %v251
    %v254 = vmul.f32 %v246, %v251
    %v256 = vlaneseq
    %v257 = vshrl.u32 %v256, 7
    %v258 = vsub.s32 0, %v257
    %v259 = vrot.slane %v219, %v258
    %v261 = vadd.f32 %v253, %v259
    %v262 = vadd.f32 %v254, %v259
    %v263 = vld [vmem:[%s7] sm:$0xf]
    %v264 = vld [vmem:[%s7 + $0x4] sm:$0xf]
    %v265 = vld [vmem:[%s7 + $0x8] sm:$0xf]
    %v266 = vld [vmem:[%s7 + $0xc] sm:$0xf]
    %v267 = vld [vmem:[%s7 + $0x10] sm:$0xf]
    %v268 = vld [vmem:[%s7 + $0x14] sm:$0xf]
    %v269 = vld [vmem:[%s7 + $0x18] sm:$0xf]
    %v270 = vld [vmem:[%s7 + $0x1c] sm:$0xf]
    %v271 = vpack.c.bf16 %v262, %v261
    %v272 = vld [vmem:[%s8] sm:$0x1]
    %v274 = vlaneseq
    %v275 = vshrl.u32 %v274, 7
    %v276 = vsub.s32 0, %v275
    %v277 = vrot.slane %v272, %v276
    %v287 = vunpack.c.l.b16 %v263
    %v288 = vunpack.c.l.b16 %v264
    %v289 = vunpack.c.l.b16 %v265
    %v290 = vunpack.c.l.b16 %v266
    %v291 = vunpack.c.l.b16 %v267
    %v292 = vunpack.c.l.b16 %v268
    %v293 = vunpack.c.l.b16 %v269
    %v294 = vunpack.c.l.b16 %v270
    %v295 = vpack.c.b16 %v288, %v287
    %v296 = vpack.c.b16 %v290, %v289
    %v297 = vpack.c.b16 %v292, %v291
    %v298 = vpack.c.b16 %v294, %v293
    %v304 = vsel %vm173, %v271, 0
    %306 = vmatprep.subr.bf16.mxu0 0
    %307 = vmatpush1.bf16.msra.mxu0 0
    %308 = vmatprep.subr.bf16.mxu0 0
    %309 = vmatpush1.bf16.msra.mxu0 0
    %310 = vmatprep.subr.bf16.mxu0 0
    %311 = vmatpush1.bf16.msra.mxu0 0
    %312 = vmatprep.subr.bf16.mxu0 0
    %313 = vmatpush1.bf16.msra.mxu0 0
    %314 = vmatprep.subr.bf16.mxu0 0
    %315 = vmatpush1.bf16.msra.mxu0 %v298
    %316 = vmatprep.subr.bf16.mxu0 0
    %317 = vmatpush1.bf16.msra.mxu0 %v297
    %318 = vmatprep.subr.bf16.mxu0 0
    %319 = vmatpush1.bf16.msra.mxu0 %v296
    %320 = vmatprep.subr.bf16.mxu0 0
    %321 = vmatpush1.bf16.msra.mxu0 %v295
    %322 = vmatprep.subr.bf16.mxu0 0
    %323 = vmatpush2.bf16.msra.mxu0 0
    %324 = vmatprep.subr.bf16.mxu0 0
    %325 = vmatpush2.bf16.msra.mxu0 0
    %326 = vmatprep.subr.bf16.mxu0 0
    %327 = vmatpush2.bf16.msra.mxu0 0
    %328 = vmatprep.subr.bf16.mxu0 0
    %329 = vmatpush2.bf16.msra.mxu0 0
    %330 = vmatprep.subr.bf16.mxu0 0
    %331 = vmatpush2.bf16.msra.mxu0 0
    %332 = vmatprep.subr.bf16.mxu0 0
    %333 = vmatpush2.bf16.msra.mxu0 0
    %334 = vmatprep.subr.bf16.mxu0 0
    %335 = vmatpush2.bf16.msra.mxu0 0
    %336 = vmatprep.subr.bf16.mxu0 0
    %337 = vmatpush2.bf16.msra.mxu0 0
    %338 = vmatprep.mubr.bf16.mxu0 0
    %339 = vmatmul.mubr.bf16.gmra.mxu0 %v304
    %v340 = vpop.f32.mrf.mxu0
    %v341 = vadd.f32 %v277, %v340
    %v342 = vpop.f32.mrf.mxu0
    %v343 = vpop.f32.mrf.mxu0
    %v344 = vadd.f32 %v277, %v343
    %v345 = vpop.f32.mrf.mxu0
    %346 = vdwg.mxu0
    %v347 = vmax.f32 %v341, 0.0
    %v348 = vmax.f32 %v344, 0.0
    %v349 = vld [vmem:[%s9] sm:$0x1]
    %v350 = vpack.c.bf16 %v348, %v347
    %v351 = vld [vmem:[#allocation2] sm:$0x1]
    %353 = vset.pattern.permute.xlu0 0
    %354 = vperm.xlu0 %353, %v351
    %v355 = vpop.permute.xlu0 %354
    %v357 = vlaneseq
    %v358 = vshrl.u32 %v357, 7
    %v359 = vsub.s32 0, %v358
    %v360 = vrot.slane %v355, %v359
    %v362 = vsel %vm86, %v349, 0
    %v365 = vsel %vm86, %v350, 0
    %367 = vmatprep.subr.bf16.mxu0 0
    %368 = vmatpush1.bf16.xpose.msra.mxu0 0
    %369 = vmatprep.subr.bf16.mxu0 0
    %370 = vmatpush1.bf16.xpose.msra.mxu0 0
    %371 = vmatprep.subr.bf16.mxu0 0
    %372 = vmatpush1.bf16.xpose.msra.mxu0 0
    %373 = vmatprep.subr.bf16.mxu0 0
    %374 = vmatpush1.bf16.xpose.msra.mxu0 0
    %375 = vmatprep.subr.bf16.mxu0 0
    %376 = vmatpush1.bf16.xpose.msra.mxu0 0
    %377 = vmatprep.subr.bf16.mxu0 0
    %378 = vmatpush1.bf16.xpose.msra.mxu0 0
    %379 = vmatprep.subr.bf16.mxu0 0
    %380 = vmatpush1.bf16.xpose.msra.mxu0 0
    %381 = vmatprep.subr.bf16.mxu0 0
    %382 = vmatpush1.bf16.xpose.msra.mxu0 %v365
    %383 = vmatprep.subr.bf16.mxu0 0
    %384 = vmatpush2.bf16.xpose.msra.mxu0 0
    %385 = vmatprep.subr.bf16.mxu0 0
    %386 = vmatpush2.bf16.xpose.msra.mxu0 0
    %387 = vmatprep.subr.bf16.mxu0 0
    %388 = vmatpush2.bf16.xpose.msra.mxu0 0
    %389 = vmatprep.subr.bf16.mxu0 0
    %390 = vmatpush2.bf16.xpose.msra.mxu0 0
    %391 = vmatprep.subr.bf16.mxu0 0
    %392 = vmatpush2.bf16.xpose.msra.mxu0 0
    %393 = vmatprep.subr.bf16.mxu0 0
    %394 = vmatpush2.bf16.xpose.msra.mxu0 0
    %395 = vmatprep.subr.bf16.mxu0 0
    %396 = vmatpush2.bf16.xpose.msra.mxu0 0
    %397 = vmatprep.subr.bf16.mxu0 0
    %398 = vmatpush2.bf16.xpose.msra.mxu0 0
    %399 = vmatprep.mubr.bf16.mxu0 0
    %400 = vmatmul.mubr.bf16.gmra.mxu0 %v362
    %v401 = vpop.f32.mrf.mxu0
    %v402 = vadd.f32 %v360, %v401
    %v403 = vpop.f32.mrf.mxu0
    %v404 = vpop.f32.mrf.mxu0
    %v405 = vpop.f32.mrf.mxu0
    %406 = vdwg.mxu0
    %v407 = vxor.u32 %v402, 2147483648
    %v408 = vmul.f32 %v407, 1.442695
    %v409 = vpow.pop %v408
    %v410 = vadd.f32 %v409, 1.0
    %v411 = vrcp.pop %v410
    %v412 = vmul.f32 1.0, %v411
    %vm413 = vcmask 122880
    %414 = vst.msk [vmem:[#allocation6] sm:$0x1] %vm413, %v412
    // Predicated region
    $region50: #{tpu_custom_call.1} parent=1 // pred_check
      _
    $region51: #{tpu_custom_call.1} parent=1 // pred_check_branch
      %416 = sbr.rel (0) target = $region53
    $region52: #{tpu_custom_call.1} parent=1 // pred_region
      %s418 = ssub.s32 16, 16
      %419 = vsyncadd [#allocation5], %s418
      %s421 = sshll.u32 [#allocation6], 4
      %s422 = int_to_ptr.vmem [resolvable:$true] %s421
      %424 = dma.vmem_to_hbm [thread:$0]  %s422, 16, %s11, [#allocation5]
    $region53: #{tpu_custom_call.1} parent=1 // pred_fallthru
      _
    // Predicated region
    $region54: #{tpu_custom_call.1} parent=1 // pred_check
      _
    $region55: #{tpu_custom_call.1} parent=1 // pred_check_branch
      %426 = sbr.rel (0) target = $region57
    $region56: #{tpu_custom_call.1} parent=1 // pred_region
      %427 = dma.done [#allocation5], 16
    $region57: #{tpu_custom_call.1} parent=1 // pred_fallthru
      _
    %428 = vsyncpa [#allocation4], 1
    %429 = vsyncpa [#allocation5], 1

</llo_original>
